<compile_context>
chip_gen: v7x
topology: tpu7x:2x2x1
jax: 0.10.0
libtpu: 0.0.40
codegen_flags: <defaults>
</compile_context>

<pallas_src>
import functools

import jax
import jax.numpy as jnp
from jax import lax
from jax.experimental import pallas as pl
from jax.experimental.pallas import tpu as pltpu


def _log_sigmoid(x):
    # numerically stable logsigmoid(x) = min(x, 0) - log1p(exp(-|x|))
    return jnp.minimum(x, 0.0) - jnp.log1p(jnp.exp(-jnp.abs(x)))


def _sgns_kernel(ei_ref, ctx_ref, out_o_ref, out_n_ref, *, total_b, n_context):
    """One batch tile.

    ei_ref : (TB, D)        gathered in_embed rows
    ctx_ref: (TB, C+N, D)   gathered out_embed rows (owords then nwords)
    out_*  : (1, 8, 128)    per-tile partial sums (lane-dense output block)
    """
    tile = pl.program_id(0)

    ei = ei_ref[...].astype(jnp.float32)            # (TB, D)
    ctx = ctx_ref[...].astype(jnp.float32)          # (TB, C+N, D)
    TB, CN, _ = ctx.shape

    # Dot products on the VPU (elementwise mul) + XLU (lane reduce); no MXU.
    s = jnp.sum(ctx * ei[:, None, :], axis=-1)      # (TB, C+N)

    # Columns < C are context words (positive sign); the rest are negative
    # samples -> fold the .neg() of the reference into the score sign.
    col = lax.broadcasted_iota(jnp.int32, (TB, CN), 1)
    is_o = col < n_context
    s_eff = jnp.where(is_o, s, -s)
    ls = _log_sigmoid(s_eff)                        # (TB, C+N)

    # Mask rows belonging to batch padding (B may not divide TB).
    row = lax.broadcasted_iota(jnp.int32, (TB, CN), 0) + tile * TB
    ls = jnp.where(row < total_b, ls, 0.0)

    part_o = -jnp.sum(jnp.where(is_o, ls, 0.0))
    part_n = -jnp.sum(jnp.where(is_o, 0.0, ls))

    out_o_ref[...] = jnp.full(out_o_ref.shape, part_o, dtype=jnp.float32)
    out_n_ref[...] = jnp.full(out_n_ref.shape, part_n, dtype=jnp.float32)


def _pick_tile_b(B, CN, D, vmem_budget_bytes):
    """Largest multiple-of-8 batch tile whose double-buffered f32 working set
    (with sublane/lane padding) fits the budget."""
    cn_pad = ((CN + 7) // 8) * 8
    d_pad = ((D + 127) // 128) * 128
    per_row_bytes = 4 * (cn_pad * d_pad + d_pad)      # ctx slab + ei row
    tb = (vmem_budget_bytes // (2 * per_row_bytes)) // 8 * 8
    tb = max(8, int(tb))
    b_pad = ((B + 7) // 8) * 8
    return min(tb, b_pad)


def sgns_forward(iword, owords, nwords, in_embed, out_embed, *,
                 tile_b=None, vmem_budget_bytes=6 * 1024 * 1024):
    """Returns (score_o, score_n) scalars, matching SGNS.forward."""
    B = iword.shape[0]
    C = owords.shape[1]
    N = nwords.shape[1]
    D = in_embed.shape[1]
    CN = C + N

    # Single combined gather for context + negative samples (glue, plain JAX).
    all_idx = jnp.concatenate([owords, nwords], axis=1)      # (B, C+N)
    embed_ctx = jnp.take(out_embed, all_idx, axis=0)         # (B, C+N, D)
    embed_i = jnp.take(in_embed, iword, axis=0)              # (B, D)

    if tile_b is None:
        tile_b = _pick_tile_b(B, CN, D, vmem_budget_bytes)
    TB = max(8, (tile_b // 8) * 8)

    # Pad the batch to a multiple of TB; padded rows are masked in-kernel.
    B_pad = ((B + TB - 1) // TB) * TB
    if B_pad != B:
        embed_i = jnp.pad(embed_i, ((0, B_pad - B), (0, 0)))
        embed_ctx = jnp.pad(embed_ctx, ((0, B_pad - B), (0, 0), (0, 0)))
    num_tiles = B_pad // TB

    kernel = functools.partial(_sgns_kernel, total_b=B, n_context=C)

    partial_o, partial_n = pl.pallas_call(
        kernel,
        grid=(num_tiles,),
        in_specs=[
            pl.BlockSpec((TB, D), lambda i: (i, 0)),
            pl.BlockSpec((TB, CN, D), lambda i: (i, 0, 0)),
        ],
        out_specs=(
            pl.BlockSpec((1, 8, 128), lambda i: (i, 0, 0)),
            pl.BlockSpec((1, 8, 128), lambda i: (i, 0, 0)),
        ),
        out_shape=(
            jax.ShapeDtypeStruct((num_tiles, 8, 128), jnp.float32),
            jax.ShapeDtypeStruct((num_tiles, 8, 128), jnp.float32),
        ),
        compiler_params=pltpu.CompilerParams(
            dimension_semantics=("parallel",)),
    )(embed_i, embed_ctx)

    # Cross-tile reduction and normalization in plain JAX (cheap: num_tiles
    # scalars), dividing by the *true* batch size exactly once.
    score_o = jnp.sum(partial_o[:, 0, 0]) / B
    score_n = jnp.sum(partial_n[:, 0, 0]) / B
    return score_o, score_n


def sgns_reference(iword, owords, nwords, in_embed, out_embed):
    """Pure-JAX reference mirroring the PyTorch forward."""
    B = iword.shape[0]
    ei = jnp.take(in_embed, iword, axis=0)[:, :, None]         # (B, D, 1)
    eo = jnp.take(out_embed, owords, axis=0)                   # (B, C, D)
    en = -jnp.take(out_embed, nwords, axis=0)                  # (B, N, D)
    s_o = jnp.matmul(eo, ei)                                   # (B, C, 1)
    s_n = jnp.matmul(en, ei)                                   # (B, N, 1)
    score_o = -jnp.sum(jax.nn.log_sigmoid(s_o)) / B
    score_n = -jnp.sum(jax.nn.log_sigmoid(s_n)) / B
    return score_o, score_n


if __name__ == "__main__":
    # Small synthetic config consistent with SGNS.__init__ / forward.
    vocab_size = 64
    e_dim = 128        # args.e_dim (lane-dense: multiple of 128)
    n_negs = 8         # args.n_negs
    batch = 32
    context = 4

    init_scale = 0.5 / e_dim
    key = jax.random.PRNGKey(0)
    k_in, k_out, k_i, k_o, k_n = jax.random.split(key, 5)

    in_embed = jax.random.uniform(
        k_in, (vocab_size, e_dim), jnp.float32, -init_scale, init_scale)
    out_embed = jax.random.uniform(
        k_out, (vocab_size, e_dim), jnp.float32, -init_scale, init_scale)

    iword = jax.random.randint(k_i, (batch,), 0, vocab_size, jnp.int32)
    owords = jax.random.randint(k_o, (batch, context), 0, vocab_size, jnp.int32)
    nwords = jax.random.randint(k_n, (batch, n_negs), 0, vocab_size, jnp.int32)

    fwd = jax.jit(functools.partial(sgns_forward, tile_b=8))   # 4 batch tiles
    score_o, score_n = fwd(iword, owords, nwords, in_embed, out_embed)
    jax.block_until_ready((score_o, score_n))

    ref_o, ref_n = sgns_reference(iword, owords, nwords, in_embed, out_embed)
    assert jnp.allclose(score_o, ref_o, atol=1e-4, rtol=1e-5), (score_o, ref_o)
    assert jnp.allclose(score_n, ref_n, atol=1e-4, rtol=1e-5), (score_n, ref_n)

    print("KERNEL_OK")
</pallas_src>

<mosaic_0001>
module attributes {stable_mosaic.version = 11 : i64} {
  func.func @_sgns_kernel(%arg0: i32, %arg1: memref<8x128xf32, #tpu.memory_space<vmem>>, %arg2: memref<8x12x128xf32, #tpu.memory_space<vmem>>, %arg3: memref<1x8x128xf32, #tpu.memory_space<vmem>>, %arg4: memref<1x8x128xf32, #tpu.memory_space<vmem>>) attributes {dimension_semantics = [#tpu.dimension_semantics<parallel>], iteration_bounds = array<i64: 4>, scalar_prefetch = 0 : i64, scratch_operands = 0 : i64, tpu.core_type = #tpu.core_type<tc>, window_params = [{transform_indices = @transform_0, window_bounds = array<i64: 8, 128>}, {transform_indices = @transform_1, window_bounds = array<i64: 8, 12, 128>}, {transform_indices = @transform_2, window_bounds = array<i64: 1, 8, 128>}, {transform_indices = @transform_3, window_bounds = array<i64: 1, 8, 128>}]} {
    %c0 = arith.constant 0 : index
    %c0_0 = arith.constant 0 : index
    %0 = vector.load %arg1[%c0, %c0_0] : memref<8x128xf32, #tpu.memory_space<vmem>>, vector<8x128xf32>
    %c0_1 = arith.constant 0 : index
    %c0_2 = arith.constant 0 : index
    %c0_3 = arith.constant 0 : index
    %1 = vector.load %arg2[%c0_1, %c0_2, %c0_3] : memref<8x12x128xf32, #tpu.memory_space<vmem>>, vector<8x12x128xf32>
    %2 = vector.shape_cast %0 : vector<8x128xf32> to vector<8x1x128xf32>
    %3 = vector.broadcast %2 : vector<8x1x128xf32> to vector<8x12x128xf32>
    %4 = arith.mulf %1, %3 : vector<8x12x128xf32>
    %cst = arith.constant dense<0.000000e+00> : vector<8x12xf32>
    %5 = vector.multi_reduction <add>, %4, %cst [2] : vector<8x12x128xf32> to vector<8x12xf32>
    %6 = tpu.iota {dimensions = array<i32: 1>} : vector<8x12xi32>
    %c4_i32 = arith.constant 4 : i32
    %7 = vector.broadcast %c4_i32 : i32 to vector<8x12xi32>
    %8 = arith.cmpi slt, %6, %7 : vector<8x12xi32>
    %cst_4 = arith.constant 0.000000e+00 : f32
    %9 = vector.broadcast %cst_4 : f32 to vector<8x12xf32>
    %10 = arith.subf %9, %5 : vector<8x12xf32>
    %11 = arith.select %8, %5, %10 : vector<8x12xi1>, vector<8x12xf32>
    %cst_5 = arith.constant 0.000000e+00 : f32
    %12 = vector.broadcast %cst_5 : f32 to vector<8x12xf32>
    %13 = arith.minimumf %11, %12 : vector<8x12xf32>
    %14 = math.absf %11 : vector<8x12xf32>
    %cst_6 = arith.constant 0.000000e+00 : f32
    %15 = vector.broadcast %cst_6 : f32 to vector<8x12xf32>
    %16 = arith.subf %15, %14 : vector<8x12xf32>
    %17 = math.exp %16 : vector<8x12xf32>
    %18 = math.log1p %17 : vector<8x12xf32>
    %19 = arith.subf %13, %18 : vector<8x12xf32>
    %20 = tpu.iota {dimensions = array<i32: 0>} : vector<8x12xi32>
    %c8_i32 = arith.constant 8 : i32
    %21 = arith.muli %arg0, %c8_i32 : i32
    %22 = vector.broadcast %21 : i32 to vector<8x12xi32>
    %23 = arith.addi %20, %22 : vector<8x12xi32>
    %c32_i32 = arith.constant 32 : i32
    %24 = vector.broadcast %c32_i32 : i32 to vector<8x12xi32>
    %25 = arith.cmpi slt, %23, %24 : vector<8x12xi32>
    %cst_7 = arith.constant 0.000000e+00 : f32
    %26 = vector.broadcast %cst_7 : f32 to vector<8x12xf32>
    %27 = arith.select %25, %19, %26 : vector<8x12xi1>, vector<8x12xf32>
    %cst_8 = arith.constant 0.000000e+00 : f32
    %28 = vector.broadcast %cst_8 : f32 to vector<8x12xf32>
    %29 = arith.select %8, %27, %28 : vector<8x12xi1>, vector<8x12xf32>
    %30 = vector.shape_cast %29 : vector<8x12xf32> to vector<1x8x12xf32>
    %cst_9 = arith.constant dense<0.000000e+00> : vector<1xf32>
    %31 = vector.multi_reduction <add>, %30, %cst_9 [1, 2] : vector<1x8x12xf32> to vector<1xf32>
    %32 = vector.shape_cast %31 : vector<1xf32> to vector<1x1x1xf32>
    %33 = vector.extract %32[0, 0, 0] : f32 from vector<1x1x1xf32>
    %cst_10 = arith.constant 0.000000e+00 : f32
    %34 = arith.subf %cst_10, %33 : f32
    %cst_11 = arith.constant 0.000000e+00 : f32
    %35 = vector.broadcast %cst_11 : f32 to vector<8x12xf32>
    %36 = arith.select %8, %35, %27 : vector<8x12xi1>, vector<8x12xf32>
    %37 = vector.shape_cast %36 : vector<8x12xf32> to vector<1x8x12xf32>
    %cst_12 = arith.constant dense<0.000000e+00> : vector<1xf32>
    %38 = vector.multi_reduction <add>, %37, %cst_12 [1, 2] : vector<1x8x12xf32> to vector<1xf32>
    %39 = vector.shape_cast %38 : vector<1xf32> to vector<1x1x1xf32>
    %40 = vector.extract %39[0, 0, 0] : f32 from vector<1x1x1xf32>
    %cst_13 = arith.constant 0.000000e+00 : f32
    %41 = arith.subf %cst_13, %40 : f32
    %42 = vector.broadcast %34 : f32 to vector<1x8x128xf32>
    %c0_14 = arith.constant 0 : index
    %c0_15 = arith.constant 0 : index
    %c0_16 = arith.constant 0 : index
    %43 = vector.load %arg3[%c0_14, %c0_15, %c0_16] : memref<1x8x128xf32, #tpu.memory_space<vmem>>, vector<1x8x128xf32>
    tpu.vector_store %arg3[%c0_14, %c0_15, %c0_16], %42 {strides = array<i32>} : memref<1x8x128xf32, #tpu.memory_space<vmem>>, vector<1x8x128xf32>,
    %44 = vector.broadcast %41 : f32 to vector<1x8x128xf32>
    %c0_17 = arith.constant 0 : index
    %c0_18 = arith.constant 0 : index
    %c0_19 = arith.constant 0 : index
    %45 = vector.load %arg4[%c0_17, %c0_18, %c0_19] : memref<1x8x128xf32, #tpu.memory_space<vmem>>, vector<1x8x128xf32>
    tpu.vector_store %arg4[%c0_17, %c0_18, %c0_19], %44 {strides = array<i32>} : memref<1x8x128xf32, #tpu.memory_space<vmem>>, vector<1x8x128xf32>,
    return
  }
  func.func @transform_0(%arg0: i32) -> (i32, i32) {
    %c0_i32 = arith.constant 0 : i32
    %c0_i32_0 = arith.constant 0 : i32
    return %arg0, %c0_i32 : i32, i32
  }
  func.func @transform_1(%arg0: i32) -> (i32, i32, i32) {
    %c0_i32 = arith.constant 0 : i32
    %c0_i32_0 = arith.constant 0 : i32
    %c0_i32_1 = arith.constant 0 : i32
    return %arg0, %c0_i32, %c0_i32_0 : i32, i32, i32
  }
  func.func @transform_2(%arg0: i32) -> (i32, i32, i32) {
    %c0_i32 = arith.constant 0 : i32
    %c0_i32_0 = arith.constant 0 : i32
    %c0_i32_1 = arith.constant 0 : i32
    return %arg0, %c0_i32, %c0_i32_0 : i32, i32, i32
  }
  func.func @transform_3(%arg0: i32) -> (i32, i32, i32) {
    %c0_i32 = arith.constant 0 : i32
    %c0_i32_0 = arith.constant 0 : i32
    %c0_i32_1 = arith.constant 0 : i32
    return %arg0, %c0_i32, %c0_i32_0 : i32, i32, i32
  }
}

</mosaic_0001>

<llo_original>
// kernel: sgns_forward.1
$region0: #{sgns_forward.1}
  #allocation0 [shape = 'u32[]', space=smem, size = 0x4, offset = 0x4, fixed_abs, tag = 'smem constant byte address 0x4 - core index']
  #allocation1 [shape = 'u32[144,128]{1,0:T(1,128)}', space=vmem, size = 0x12000, scoped, tag = 'internal scratch']
  %s0 = inlined_call_operand.vmem [shape: f32[32,128], index: 0, kind: input, shape index: {}]
  %s1 = inlined_call_operand.vmem [shape: f32[32,12,128], index: 1, kind: input, shape index: {}]
  %s2 = inlined_call_operand.vmem [shape: f32[4,8,128], index: 2, kind: output, shape index: {0}]
  %s3 = inlined_call_operand.vmem [shape: f32[4,8,128], index: 3, kind: output, shape index: {1}]
  %4 = xla_tuple %s2, %s3
  %s5 = sld [smem:[#allocation0]]
  $region49: #{sgns_forward.1} parent=0
    _
  %s7 = ssub.s32 1, %s5
  %s8 = scalar_select 0, %s7, %s5
  loop: start=0, step=1, limit=6
  $region2: #{sgns_forward.1} parent=0 // loop_pre_header
    _
  $region3: #{sgns_forward.1} parent=0 // loop_header
    %s10 = sphi 0, %s14
    %p11 = scmp.ge.s32.totalorder %s10, 6
    %s20 = sphi 0, %s22
    %s23 = sphi 0, %s20
    %s24 = sphi 0, %s23
    %s40 = sphi 0, %s24
    %s46 = sphi 0, %s48
    %s49 = sphi 0, %s46
    %s50 = sphi 0, %s49
    %s66 = sphi 0, %s50
    %s72 = sphi 0, %s74
    %s75 = sphi 0, %s72
    %s76 = sphi 0, %s75
    %s92 = sphi 0, %s76
    %s98 = sphi 0, %s100
    %s101 = sphi 0, %s98
    %s102 = sphi 0, %s101
    %s118 = sphi 0, %s102
  $region4: #{sgns_forward.1} parent=0 // loop_header_branch
    %13 = sbr.rel (%p11) target = $region8
  $region5: #{sgns_forward.1} parent=0 // loop_body
    %s15 = ssub.s32 %s10, 1
    %s16 = ssub.s32 %s10, 2
    %s17 = sadd.s32 %s10, 1
    %s18 = ssub.s32 %s10, %s17
    %p19 = scmp.eq.s32.totalorder %s18, 0
    %s21 = sadd.s32 %s20, 1
    %s22 = scalar_select %p19, %s20, %s21
    %p25 = pneg %p19
    %p26 = scmp.eq.s32.totalorder %s10, 3
    %p27 = por %p25, %p26
    %p28 = scmp.ne.s32.totalorder %s20, %s23
    %p29 = scmp.eq.s32.totalorder %s10, 0
    %p30 = por %p28, %p29
    %p31 = scmp.ne.s32.totalorder %s20, %s23
    %p32 = scmp.eq.s32.totalorder %s15, 3
    %p33 = por %p31, %p32
    %p34 = scmp.ne.s32.totalorder %s23, %s24
    %p35 = scmp.eq.s32.totalorder %s15, 0
    %p36 = por %p34, %p35
    %p37 = scmp.ne.s32.totalorder %s23, %s24
    %p38 = scmp.eq.s32.totalorder %s16, 3
    %p39 = por %p37, %p38
    %p41 = scmp.ne.s32.totalorder %s24, %s40
    %p42 = scmp.eq.s32.totalorder %s16, 0
    %p43 = por %p41, %p42
    %s44 = ssub.s32 %s10, %s17
    %p45 = scmp.eq.s32.totalorder %s44, 0
    %s47 = sadd.s32 %s46, 1
    %s48 = scalar_select %p45, %s46, %s47
    %p51 = pneg %p45
    %p52 = scmp.eq.s32.totalorder %s10, 3
    %p53 = por %p51, %p52
    %p54 = scmp.ne.s32.totalorder %s46, %s49
    %p55 = scmp.eq.s32.totalorder %s10, 0
    %p56 = por %p54, %p55
    %p57 = scmp.ne.s32.totalorder %s46, %s49
    %p58 = scmp.eq.s32.totalorder %s15, 3
    %p59 = por %p57, %p58
    %p60 = scmp.ne.s32.totalorder %s49, %s50
    %p61 = scmp.eq.s32.totalorder %s15, 0
    %p62 = por %p60, %p61
    %p63 = scmp.ne.s32.totalorder %s49, %s50
    %p64 = scmp.eq.s32.totalorder %s16, 3
    %p65 = por %p63, %p64
    %p67 = scmp.ne.s32.totalorder %s50, %s66
    %p68 = scmp.eq.s32.totalorder %s16, 0
    %p69 = por %p67, %p68
    %s70 = ssub.s32 %s10, %s17
    %p71 = scmp.eq.s32.totalorder %s70, 0
    %s73 = sadd.s32 %s72, 1
    %s74 = scalar_select %p71, %s72, %s73
    %p77 = pneg %p71
    %p78 = scmp.eq.s32.totalorder %s10, 3
    %p79 = por %p77, %p78
    %p80 = scmp.ne.s32.totalorder %s72, %s75
    %p81 = scmp.eq.s32.totalorder %s10, 0
    %p82 = por %p80, %p81
    %p83 = scmp.ne.s32.totalorder %s72, %s75
    %p84 = scmp.eq.s32.totalorder %s15, 3
    %p85 = por %p83, %p84
    %p86 = scmp.ne.s32.totalorder %s75, %s76
    %p87 = scmp.eq.s32.totalorder %s15, 0
    %p88 = por %p86, %p87
    %p89 = scmp.ne.s32.totalorder %s75, %s76
    %p90 = scmp.eq.s32.totalorder %s16, 3
    %p91 = por %p89, %p90
    %p93 = scmp.ne.s32.totalorder %s76, %s92
    %p94 = scmp.eq.s32.totalorder %s16, 0
    %p95 = por %p93, %p94
    %s96 = ssub.s32 %s10, %s17
    %p97 = scmp.eq.s32.totalorder %s96, 0
    %s99 = sadd.s32 %s98, 1
    %s100 = scalar_select %p97, %s98, %s99
    %p103 = pneg %p97
    %p104 = scmp.eq.s32.totalorder %s10, 3
    %p105 = por %p103, %p104
    %p106 = scmp.ne.s32.totalorder %s98, %s101
    %p107 = scmp.eq.s32.totalorder %s10, 0
    %p108 = por %p106, %p107
    %p109 = scmp.ne.s32.totalorder %s98, %s101
    %p110 = scmp.eq.s32.totalorder %s15, 3
    %p111 = por %p109, %p110
    %p112 = scmp.ne.s32.totalorder %s101, %s102
    %p113 = scmp.eq.s32.totalorder %s15, 0
    %p114 = por %p112, %p113
    %p115 = scmp.ne.s32.totalorder %s101, %s102
    %p116 = scmp.eq.s32.totalorder %s16, 3
    %p117 = por %p115, %p116
    %p119 = scmp.ne.s32.totalorder %s102, %s118
    %p120 = scmp.eq.s32.totalorder %s16, 0
    %p121 = por %p119, %p120
    %p122 = scmp.le.s32.totalorder 1, %s10
    %p123 = scmp.lt.s32.totalorder %s10, 5
    %p124 = pnand %p122, %p123
    %p125 = pneg %p124
    // Predicated region
    $region9: #{sgns_forward.1} parent=5 // pred_check
      _
    $region10: #{sgns_forward.1} parent=5 // pred_check_branch
      %127 = sbr.rel (%p124) target = $region12
    $region11: #{sgns_forward.1} parent=5 // pred_region
      %s128 = ssub.s32 %s10, 1
    $region12: #{sgns_forward.1} parent=5 // pred_fallthru
      _
    %p129 = scmp.lt.s32.totalorder %s10, 4
    // Predicated region
    $region13: #{sgns_forward.1} parent=5 // pred_check
      %p130 = pneg %p129
    $region14: #{sgns_forward.1} parent=5 // pred_check_branch
      %132 = sbr.rel (%p130) target = $region16
    $region15: #{sgns_forward.1} parent=5 // pred_region
      // Predicated region
      $region17: #{sgns_forward.1} parent=15 // pred_check
        %p133 = pneg %p30
      $region18: #{sgns_forward.1} parent=15 // pred_check_branch
        %135 = sbr.rel (%p133) target = $region20
      $region19: #{sgns_forward.1} parent=15 // pred_region
        %p136 = scmp.lt.s32.totalorder %s10, 3
        %s137 = scalar_select %p136, %s10, 3
        %s138 = smul.addr %s137, 8
        %s139 = scalar_lea.vmem %s0, %s138
      $region20: #{sgns_forward.1} parent=15 // pred_fallthru
        _
      // Predicated region
      $region21: #{sgns_forward.1} parent=15 // pred_check
        %p140 = pneg %p56
      $region22: #{sgns_forward.1} parent=15 // pred_check_branch
        %142 = sbr.rel (%p140) target = $region24
      $region23: #{sgns_forward.1} parent=15 // pred_region
        %s143 = smul.u32 8, %s10
        %p144 = scmp.lt.s32.totalorder %s143, 31
        %s145 = scalar_select %p144, %s143, 31
        %s146 = smul.addr %s145, 2
        %s147 = smul.addr %s146, 8
        %s148 = scalar_lea.vmem %s1, %s147
        %s149 = smul.u32 8, %s10
      $region24: #{sgns_forward.1} parent=15 // pred_fallthru
        _
    $region16: #{sgns_forward.1} parent=5 // pred_fallthru
      _
    %p150 = scmp.le.s32.totalorder 1, %s10
    %p151 = scmp.lt.s32.totalorder %s10, 5
    %p152 = pnand %p150, %p151
    %p153 = pneg %p152
    // Predicated region
    $region25: #{sgns_forward.1} parent=5 // pred_check
      _
    $region26: #{sgns_forward.1} parent=5 // pred_check_branch
      %155 = sbr.rel (%p152) target = $region28
    $region27: #{sgns_forward.1} parent=5 // pred_region
      %s156 = ssub.s32 %s10, 1
      %p157 = scmp.lt.s32.totalorder %s15, 3
      %s158 = scalar_select %p157, %s15, 3
      %s159 = smul.addr %s158, 8
      %s160 = scalar_lea.vmem %s0, %s159
      %p161 = pneg %p36
      %p162 = pneg %p33
      %s163 = smul.u32 8, %s15
      %p164 = scmp.lt.s32.totalorder %s163, 31
      %s165 = scalar_select %p164, %s163, 31
      %s166 = smul.addr %s165, 2
      %s167 = smul.addr %s166, 8
      %s168 = scalar_lea.vmem %s1, %s167
      %p169 = pneg %p62
      %p170 = pneg %p59
      %p171 = pneg %p88
      %p172 = pneg %p85
      %p173 = scmp.lt.s32.totalorder %s15, 3
      %s174 = scalar_select %p173, %s15, 3
      %s175 = smul.addr %s174, 8
      %s176 = scalar_lea.vmem %s2, %s175
      %p177 = pneg %p114
      %p178 = pneg %p111
      %p179 = scmp.lt.s32.totalorder %s15, 3
      %s180 = scalar_select %p179, %s15, 3
      %s181 = smul.addr %s180, 8
      %s182 = scalar_lea.vmem %s3, %s181
      %p183 = scmp.lt.s32.totalorder %s15, 3
      %s184 = scalar_select %p183, %s15, 3
      %s185 = smul.addr %s184, 8
      %s186 = scalar_lea.vmem %s0, %s185
      %s187 = smul.u32 8, %s15
      %p188 = scmp.lt.s32.totalorder %s187, 31
      %s189 = scalar_select %p188, %s187, 31
      %s190 = smul.addr %s189, 2
      %s191 = smul.addr %s190, 8
      %s192 = scalar_lea.vmem %s1, %s191
      %s193 = smul.u32 8, %s15
      %p194 = scmp.lt.s32.totalorder %s15, 3
      %s195 = scalar_select %p194, %s15, 3
      %s196 = smul.addr %s195, 8
      %s197 = scalar_lea.vmem %s2, %s196
      %p198 = scmp.lt.s32.totalorder %s15, 3
      %s199 = scalar_select %p198, %s15, 3
      %s200 = smul.addr %s199, 8
      %s201 = scalar_lea.vmem %s3, %s200
      %v202 = vld [vmem:[%s186] sm:$0xff]
      %v203 = vld [vmem:[%s192] sm:$0xff]
      %v204 = vld [vmem:[%s192 + $0x8] sm:$0xf]
      %v205 = vld [vmem:[%s192 + $0x10] sm:$0xff]
      %v206 = vld [vmem:[%s192 + $0x18] sm:$0xf]
      %v207 = vld [vmem:[%s192 + $0x20] sm:$0xff]
      %v208 = vld [vmem:[%s192 + $0x28] sm:$0xf]
      %v209 = vld [vmem:[%s192 + $0x30] sm:$0xff]
      %v210 = vld [vmem:[%s192 + $0x38] sm:$0xf]
      %v211 = vld [vmem:[%s192 + $0x40] sm:$0xff]
      %v212 = vld [vmem:[%s192 + $0x48] sm:$0xf]
      %v213 = vld [vmem:[%s192 + $0x50] sm:$0xff]
      %v214 = vld [vmem:[%s192 + $0x58] sm:$0xf]
      %v215 = vld [vmem:[%s192 + $0x60] sm:$0xff]
      %v216 = vld [vmem:[%s192 + $0x68] sm:$0xf]
      %v217 = vld [vmem:[%s192 + $0x70] sm:$0xff]
      %v218 = vld [vmem:[%s192 + $0x78] sm:$0xf]
      %v220 = vcombine.high %v202, %v202
      %v222 = vunpack.c.l.s4 1966171168
      %v223 = vunpack.c.0.s8 %v222
      %v224 = vlaneseq
      %v225 = vshrl.u32 %v224, 7
      %v226 = vsub.s32 %v223, %v225
      %v227 = vrot.slane %v202, %v226
      %v229 = vunpack.c.l.s4 1966171168
      %v230 = vunpack.c.0.s8 %v229
      %v231 = vlaneseq
      %v232 = vshrl.u32 %v231, 7
      %v233 = vsub.s32 %v230, %v232
      %v234 = vrot.slane %v220, %v233
      %v235 = vcombine.high %v227, %v227
      %v236 = vcombine.high %v234, %v234
      %v238 = vunpack.c.l.s4 1966171168
      %v239 = vunpack.c.0.s8 %v238
      %v240 = vlaneseq
      %v241 = vshrl.u32 %v240, 7
      %v242 = vsub.s32 %v239, %v241
      %v243 = vrot.slane %v227, %v242
      %v245 = vunpack.c.l.s4 1966171168
      %v246 = vunpack.c.0.s8 %v245
      %v247 = vlaneseq
      %v248 = vshrl.u32 %v247, 7
      %v249 = vsub.s32 %v246, %v248
      %v250 = vrot.slane %v234, %v249
      %v252 = vunpack.c.l.s4 1966171168
      %v253 = vunpack.c.0.s8 %v252
      %v254 = vlaneseq
      %v255 = vshrl.u32 %v254, 7
      %v256 = vsub.s32 %v253, %v255
      %v257 = vrot.slane %v235, %v256
      %v259 = vunpack.c.l.s4 1966171168
      %v260 = vunpack.c.0.s8 %v259
      %v261 = vlaneseq
      %v262 = vshrl.u32 %v261, 7
      %v263 = vsub.s32 %v260, %v262
      %v264 = vrot.slane %v236, %v263
      %v265 = vcombine.high %v243, %v243
      %v266 = vcombine.high %v250, %v250
      %v267 = vcombine.high %v257, %v257
      %v268 = vcombine.high %v264, %v264
      %v269 = vlaneseq
      %v270 = vshrl.u32 %v269, 7
      %v271 = vsub.s32 0, %v270
      %v272 = vrot.slane %v243, %v271
      %v273 = vlaneseq
      %v274 = vshrl.u32 %v273, 7
      %v275 = vsub.s32 0, %v274
      %v276 = vrot.slane %v257, %v275
      %v277 = vlaneseq
      %v278 = vshrl.u32 %v277, 7
      %v279 = vsub.s32 0, %v278
      %v280 = vrot.slane %v265, %v279
      %v281 = vlaneseq
      %v282 = vshrl.u32 %v281, 7
      %v283 = vsub.s32 0, %v282
      %v284 = vrot.slane %v267, %v283
      %v285 = vlaneseq
      %v286 = vshrl.u32 %v285, 7
      %v287 = vsub.s32 0, %v286
      %v288 = vrot.slane %v250, %v287
      %v289 = vlaneseq
      %v290 = vshrl.u32 %v289, 7
      %v291 = vsub.s32 0, %v290
      %v292 = vrot.slane %v264, %v291
      %v293 = vlaneseq
      %v294 = vshrl.u32 %v293, 7
      %v295 = vsub.s32 0, %v294
      %v296 = vrot.slane %v266, %v295
      %v297 = vlaneseq
      %v298 = vshrl.u32 %v297, 7
      %v299 = vsub.s32 0, %v298
      %v300 = vrot.slane %v268, %v299
      %v309 = vmul.f32 %v203, %v272
      %v310 = vmul.f32 %v204, %v272
      %v311 = vmul.f32 %v205, %v276
      %v312 = vmul.f32 %v206, %v276
      %v313 = vmul.f32 %v207, %v280
      %v314 = vmul.f32 %v208, %v280
      %v315 = vmul.f32 %v209, %v284
      %v316 = vmul.f32 %v210, %v284
      %v317 = vmul.f32 %v211, %v288
      %v318 = vmul.f32 %v212, %v288
      %v319 = vmul.f32 %v213, %v292
      %v320 = vmul.f32 %v214, %v292
      %v321 = vmul.f32 %v215, %v296
      %v322 = vmul.f32 %v216, %v296
      %v323 = vmul.f32 %v217, %v300
      %v324 = vmul.f32 %v218, %v300
      %325 = vadd.xlane.f32.xlu0 %v309
      %v326 = vpop.xlane.xlu0 %325
      %vm327 = vcmask 1043456
      %v328 = vsel %vm327, %v310, 0.0
      %329 = vadd.xlane.f32.xlu0 %v328
      %v330 = vpop.xlane.xlu0 %329
      %331 = vadd.xlane.f32.xlu0 %v311
      %v332 = vpop.xlane.xlu0 %331
      %v333 = vsel %vm327, %v312, 0.0
      %334 = vadd.xlane.f32.xlu0 %v333
      %v335 = vpop.xlane.xlu0 %334
      %336 = vadd.xlane.f32.xlu0 %v313
      %v337 = vpop.xlane.xlu0 %336
      %v338 = vsel %vm327, %v314, 0.0
      %339 = vadd.xlane.f32.xlu0 %v338
      %v340 = vpop.xlane.xlu0 %339
      %341 = vadd.xlane.f32.xlu0 %v315
      %v342 = vpop.xlane.xlu0 %341
      %v343 = vsel %vm327, %v316, 0.0
      %344 = vadd.xlane.f32.xlu0 %v343
      %v345 = vpop.xlane.xlu0 %344
      %346 = vadd.xlane.f32.xlu0 %v317
      %v347 = vpop.xlane.xlu0 %346
      %v348 = vsel %vm327, %v318, 0.0
      %349 = vadd.xlane.f32.xlu0 %v348
      %v350 = vpop.xlane.xlu0 %349
      %351 = vadd.xlane.f32.xlu0 %v319
      %v352 = vpop.xlane.xlu0 %351
      %v353 = vsel %vm327, %v320, 0.0
      %354 = vadd.xlane.f32.xlu0 %v353
      %v355 = vpop.xlane.xlu0 %354
      %356 = vadd.xlane.f32.xlu0 %v321
      %v357 = vpop.xlane.xlu0 %356
      %v358 = vsel %vm327, %v322, 0.0
      %359 = vadd.xlane.f32.xlu0 %v358
      %v360 = vpop.xlane.xlu0 %359
      %361 = vadd.xlane.f32.xlu0 %v323
      %v362 = vpop.xlane.xlu0 %361
      %v363 = vsel %vm327, %v324, 0.0
      %364 = vadd.xlane.f32.xlu0 %v363
      %v365 = vpop.xlane.xlu0 %364
      %v366 = vlaneseq
      %v367 = vand.u32 %v366, 127
      %vm368 = vcmp.lt.s32.totalorder %v367, 4
      %v369 = vsub.f32 0.0, %v326
      %v370 = vsub.f32 0.0, %v330
      %v371 = vsub.f32 0.0, %v332
      %v372 = vsub.f32 0.0, %v335
      %v373 = vsub.f32 0.0, %v337
      %v374 = vsub.f32 0.0, %v340
      %v375 = vsub.f32 0.0, %v342
      %v376 = vsub.f32 0.0, %v345
      %v377 = vsub.f32 0.0, %v347
      %v378 = vsub.f32 0.0, %v350
      %v379 = vsub.f32 0.0, %v352
      %v380 = vsub.f32 0.0, %v355
      %v381 = vsub.f32 0.0, %v357
      %v382 = vsub.f32 0.0, %v360
      %v383 = vsub.f32 0.0, %v362
      %v384 = vsub.f32 0.0, %v365
      %v401 = vlaneseq
      %v402 = vshrl.u32 %v401, 7
      %v403 = vsub.s32 %v367, %v402
      %v404 = vrot.slane %v326, %v403
      %v405 = vadd.s32 %v367, 4294967288
      %v406 = vlaneseq
      %v407 = vshrl.u32 %v406, 7
      %v408 = vsub.s32 %v405, %v407
      %v409 = vrot.slane %v330, %v408
      %vm410 = vcmask 130112
      %v411 = vsel %vm410, %v409, %v404
      %v412 = vlaneseq
      %v413 = vshrl.u32 %v412, 7
      %v414 = vsub.s32 %v367, %v413
      %v415 = vrot.slane %v332, %v414
      %v416 = vlaneseq
      %v417 = vshrl.u32 %v416, 7
      %v418 = vsub.s32 %v405, %v417
      %v419 = vrot.slane %v335, %v418
      %v420 = vsel %vm410, %v419, %v415
      %v421 = vlaneseq
      %v422 = vshrl.u32 %v421, 7
      %v423 = vsub.s32 %v367, %v422
      %v424 = vrot.slane %v337, %v423
      %v425 = vlaneseq
      %v426 = vshrl.u32 %v425, 7
      %v427 = vsub.s32 %v405, %v426
      %v428 = vrot.slane %v340, %v427
      %v429 = vsel %vm410, %v428, %v424
      %v430 = vlaneseq
      %v431 = vshrl.u32 %v430, 7
      %v432 = vsub.s32 %v367, %v431
      %v433 = vrot.slane %v342, %v432
      %v434 = vlaneseq
      %v435 = vshrl.u32 %v434, 7
      %v436 = vsub.s32 %v405, %v435
      %v437 = vrot.slane %v345, %v436
      %v438 = vsel %vm410, %v437, %v433
      %v439 = vlaneseq
      %v440 = vshrl.u32 %v439, 7
      %v441 = vsub.s32 %v367, %v440
      %v442 = vrot.slane %v347, %v441
      %v443 = vlaneseq
      %v444 = vshrl.u32 %v443, 7
      %v445 = vsub.s32 %v405, %v444
      %v446 = vrot.slane %v350, %v445
      %v447 = vsel %vm410, %v446, %v442
      %v448 = vlaneseq
      %v449 = vshrl.u32 %v448, 7
      %v450 = vsub.s32 %v367, %v449
      %v451 = vrot.slane %v352, %v450
      %v452 = vlaneseq
      %v453 = vshrl.u32 %v452, 7
      %v454 = vsub.s32 %v405, %v453
      %v455 = vrot.slane %v355, %v454
      %v456 = vsel %vm410, %v455, %v451
      %v457 = vlaneseq
      %v458 = vshrl.u32 %v457, 7
      %v459 = vsub.s32 %v367, %v458
      %v460 = vrot.slane %v357, %v459
      %v461 = vlaneseq
      %v462 = vshrl.u32 %v461, 7
      %v463 = vsub.s32 %v405, %v462
      %v464 = vrot.slane %v360, %v463
      %v465 = vsel %vm410, %v464, %v460
      %v466 = vlaneseq
      %v467 = vshrl.u32 %v466, 7
      %v468 = vsub.s32 %v367, %v467
      %v469 = vrot.slane %v362, %v468
      %v470 = vlaneseq
      %v471 = vshrl.u32 %v470, 7
      %v472 = vsub.s32 %v405, %v471
      %v473 = vrot.slane %v365, %v472
      %v474 = vsel %vm410, %v473, %v469
      %vm475 = vcmask 1041409
      %v476 = vsel %vm475, %v420, %v411
      %vm477 = vcmask 1042434
      %v478 = vsel %vm477, %v429, %v476
      %vm479 = vcmask 1043459
      %v480 = vsel %vm479, %v438, %v478
      %vm481 = vcmask 1044484
      %v482 = vsel %vm481, %v447, %v480
      %vm483 = vcmask 1045509
      %v484 = vsel %vm483, %v456, %v482
      %vm485 = vcmask 1046534
      %v486 = vsel %vm485, %v465, %v484
      %vm487 = vcmask 1047559
      %v488 = vsel %vm487, %v474, %v486
      %v506 = vlaneseq
      %v507 = vshrl.u32 %v506, 7
      %v508 = vsub.s32 %v367, %v507
      %v509 = vrot.slane %v369, %v508
      %v510 = vlaneseq
      %v511 = vshrl.u32 %v510, 7
      %v512 = vsub.s32 %v405, %v511
      %v513 = vrot.slane %v370, %v512
      %v514 = vsel %vm410, %v513, %v509
      %v515 = vlaneseq
      %v516 = vshrl.u32 %v515, 7
      %v517 = vsub.s32 %v367, %v516
      %v518 = vrot.slane %v371, %v517
      %v519 = vlaneseq
      %v520 = vshrl.u32 %v519, 7
      %v521 = vsub.s32 %v405, %v520
      %v522 = vrot.slane %v372, %v521
      %v523 = vsel %vm410, %v522, %v518
      %v524 = vlaneseq
      %v525 = vshrl.u32 %v524, 7
      %v526 = vsub.s32 %v367, %v525
      %v527 = vrot.slane %v373, %v526
      %v528 = vlaneseq
      %v529 = vshrl.u32 %v528, 7
      %v530 = vsub.s32 %v405, %v529
      %v531 = vrot.slane %v374, %v530
      %v532 = vsel %vm410, %v531, %v527
      %v533 = vlaneseq
      %v534 = vshrl.u32 %v533, 7
      %v535 = vsub.s32 %v367, %v534
      %v536 = vrot.slane %v375, %v535
      %v537 = vlaneseq
      %v538 = vshrl.u32 %v537, 7
      %v539 = vsub.s32 %v405, %v538
      %v540 = vrot.slane %v376, %v539
      %v541 = vsel %vm410, %v540, %v536
      %v542 = vlaneseq
      %v543 = vshrl.u32 %v542, 7
      %v544 = vsub.s32 %v367, %v543
      %v545 = vrot.slane %v377, %v544
      %v546 = vlaneseq
      %v547 = vshrl.u32 %v546, 7
      %v548 = vsub.s32 %v405, %v547
      %v549 = vrot.slane %v378, %v548
      %v550 = vsel %vm410, %v549, %v545
      %v551 = vlaneseq
      %v552 = vshrl.u32 %v551, 7
      %v553 = vsub.s32 %v367, %v552
      %v554 = vrot.slane %v379, %v553
      %v555 = vlaneseq
      %v556 = vshrl.u32 %v555, 7
      %v557 = vsub.s32 %v405, %v556
      %v558 = vrot.slane %v380, %v557
      %v559 = vsel %vm410, %v558, %v554
      %v560 = vlaneseq
      %v561 = vshrl.u32 %v560, 7
      %v562 = vsub.s32 %v367, %v561
      %v563 = vrot.slane %v381, %v562
      %v564 = vlaneseq
      %v565 = vshrl.u32 %v564, 7
      %v566 = vsub.s32 %v405, %v565
      %v567 = vrot.slane %v382, %v566
      %v568 = vsel %vm410, %v567, %v563
      %v569 = vlaneseq
      %v570 = vshrl.u32 %v569, 7
      %v571 = vsub.s32 %v367, %v570
      %v572 = vrot.slane %v383, %v571
      %v573 = vlaneseq
      %v574 = vshrl.u32 %v573, 7
      %v575 = vsub.s32 %v405, %v574
      %v576 = vrot.slane %v384, %v575
      %v577 = vsel %vm410, %v576, %v572
      %v578 = vsel %vm475, %v523, %v514
      %v579 = vsel %vm477, %v532, %v578
      %v580 = vsel %vm479, %v541, %v579
      %v581 = vsel %vm481, %v550, %v580
      %v582 = vsel %vm483, %v559, %v581
      %v583 = vsel %vm485, %v568, %v582
      %v584 = vsel %vm487, %v577, %v583
      %v586 = vsel %vm368, %v488, %v584
      %v587 = vmin.f32 %v586, 0.0
      %v588 = vand.u32 2147483647, %v586
      %v589 = vsub.f32 0.0, %v588
      %v590 = vmul.f32 %v589, 1.442695
      %v591 = vpow.pop %v590
      %v592 = vadd.f32 %v591, 1.0
      %v593 = vlog2.pop %v592
      %v594 = vmul.f32 %v593, 0.6931472
      %v595 = vmul.f32 -0.5, %v591
      %v596 = vadd.f32 %v595, 1.0
      %v597 = vmul.f32 %v596, %v591
      %v598 = vand.u32 2147483647, %v591
      %vm599 = vcmp.lt.f32.partialorder %v598, 0.0004427343
      %v600 = vsel %vm599, %v597, %v594
      %v601 = vsub.f32 %v587, %v600
      %v602 = vlaneseq
      %v603 = vshrl.u32 %v602, 7
      %s604 = smul.u32 %s15, 8
      %v605 = vstv %s604
      %v606 = vadd.s32 %v603, %v605
      %vm607 = vcmp.lt.s32.totalorder %v606, 32
      %v608 = vsel %vm607, %v601, 0.0
      %v609 = vsel %vm368, %v608, 0.0
      %vm610 = vcmask 97280
      %v611 = vsel %vm610, %v609, 0.0
      %612 = vadd.xlane.f32.xlu0 %v611
      %v613 = vpop.xlane.xlu0 %612
      %v614 = vrot.slane %v613, 4
      %v615 = vadd.f32 %v613, %v614
      %v616 = vrot.slane %v615, 2
      %v617 = vadd.f32 %v615, %v616
      %v618 = vrot.slane %v617, 1
      %v619 = vadd.f32 %v617, %v618
      %s620 = vtos %v619
      %s621 = ssub.f32 0.0, %s620
      %v622 = vsel %vm368, 0.0, %v608
      %v623 = vsel %vm610, %v622, 0.0
      %624 = vadd.xlane.f32.xlu0 %v623
      %v625 = vpop.xlane.xlu0 %624
      %v626 = vrot.slane %v625, 4
      %v627 = vadd.f32 %v625, %v626
      %v628 = vrot.slane %v627, 2
      %v629 = vadd.f32 %v627, %v628
      %v630 = vrot.slane %v629, 1
      %v631 = vadd.f32 %v629, %v630
      %s632 = vtos %v631
      %s633 = ssub.f32 0.0, %s632
      %v634 = vstv %s621
      %635 = vst [vmem:[%s197] sm:$0xff] %v634
      %v636 = vstv %s633
      %637 = vst [vmem:[%s201] sm:$0xff] %v636
      %p638 = scmp.lt.s32.totalorder %s15, 3
      %s639 = scalar_select %p638, %s15, 3
      %s640 = smul.addr %s639, 8
      %s641 = scalar_lea.vmem %s2, %s640
      %p642 = scmp.lt.s32.totalorder %s15, 3
      %s643 = scalar_select %p642, %s15, 3
      %s644 = smul.addr %s643, 8
      %s645 = scalar_lea.vmem %s3, %s644
      // Predicated region
      $region29: #{sgns_forward.1} parent=27 // pred_check
        %p646 = pneg %p85
      $region30: #{sgns_forward.1} parent=27 // pred_check_branch
        %648 = sbr.rel (%p646) target = $region32
      $region31: #{sgns_forward.1} parent=27 // pred_region
        _
      $region32: #{sgns_forward.1} parent=27 // pred_fallthru
        _
      // Predicated region
      $region33: #{sgns_forward.1} parent=27 // pred_check
        %p649 = pneg %p111
      $region34: #{sgns_forward.1} parent=27 // pred_check_branch
        %651 = sbr.rel (%p649) target = $region36
      $region35: #{sgns_forward.1} parent=27 // pred_region
        _
      $region36: #{sgns_forward.1} parent=27 // pred_fallthru
        _
    $region28: #{sgns_forward.1} parent=5 // pred_fallthru
      _
    %p652 = scmp.le.s32.totalorder 2, %s10
    // Predicated region
    $region37: #{sgns_forward.1} parent=5 // pred_check
      %p653 = pneg %p652
    $region38: #{sgns_forward.1} parent=5 // pred_check_branch
      %655 = sbr.rel (%p653) target = $region40
    $region39: #{sgns_forward.1} parent=5 // pred_region
      %s656 = ssub.s32 %s10, 2
      // Predicated region
      $region41: #{sgns_forward.1} parent=39 // pred_check
        %p657 = pneg %p91
      $region42: #{sgns_forward.1} parent=39 // pred_check_branch
        %659 = sbr.rel (%p657) target = $region44
      $region43: #{sgns_forward.1} parent=39 // pred_region
        %p660 = scmp.lt.s32.totalorder %s16, 3
        %s661 = scalar_select %p660, %s16, 3
        %s662 = smul.addr %s661, 8
        %s663 = scalar_lea.vmem %s2, %s662
      $region44: #{sgns_forward.1} parent=39 // pred_fallthru
        _
      // Predicated region
      $region45: #{sgns_forward.1} parent=39 // pred_check
        %p664 = pneg %p117
      $region46: #{sgns_forward.1} parent=39 // pred_check_branch
        %666 = sbr.rel (%p664) target = $region48
      $region47: #{sgns_forward.1} parent=39 // pred_region
        %p667 = scmp.lt.s32.totalorder %s16, 3
        %s668 = scalar_select %p667, %s16, 3
        %s669 = smul.addr %s668, 8
        %s670 = scalar_lea.vmem %s3, %s669
      $region48: #{sgns_forward.1} parent=39 // pred_fallthru
        _
    $region40: #{sgns_forward.1} parent=5 // pred_fallthru
      _
  $region6: #{sgns_forward.1} parent=0 // loop_footer
    %s14 = sadd.s32 1, %s10
  $region7: #{sgns_forward.1} parent=0 // loop_footer_branch
    %9 = sbr.rel target = $region3
  $region8: #{sgns_forward.1} parent=0 // loop_exit
    _

</llo_original>
